<compile_context>
chip_gen: v6e
topology: v6e:2x2x1
jax: 0.10.0
libtpu: 0.0.40
codegen_flags: <defaults>
</compile_context>

<pallas_src>
import jax
import jax.numpy as jnp
from jax.experimental import pallas as pl
from jax.experimental.pallas import tpu as pltpu

HIGHEST = jax.lax.Precision.HIGHEST


def lstm_kernel(xg_ref, whh_ref, wl_ref, bl_ref, out_ref):
    """Single invocation: sequential LSTM recurrence + classifier.

    xg_ref : (T*B, 4H) pre-gated inputs (emb @ W_ih + b, g-gate cols pre-scaled x2),
             time-major: rows [t*B, (t+1)*B) hold timestep t.
    whh_ref: (H, 4H)  gate-stacked [i,f,g,o] recurrent weights (pre-transposed, g cols x2).
    wl_ref : (H, Cp)  classifier weight^T, lane-padded;  bl_ref: (1, Cp) classifier bias.
    out_ref: (B, Cp)  logits (lane-dense store).
    """
    TB = xg_ref.shape[0]
    H = whh_ref.shape[0]
    B = out_ref.shape[0]
    T = TB // B

    whh = whh_ref[...]  # hoist loop-invariant weight load out of the loop body

    def step(t, carry):
        h, c = carry
        row = pl.multiple_of(t * B, 8)                     # B is padded to the 8-sublane grain
        gates = xg_ref[pl.ds(row, B), :] + jnp.dot(
            h, whh, preferred_element_type=jnp.float32)    # (B, 4H) lane-dense MXU push
        # Single full-vreg EUP pass; g recovered via tanh(z) = 2*sigmoid(2z) - 1 (g cols
        # were pre-scaled by 2 at weight-prep time).  PyTorch gate order: i, f, g, o.
        zs = jax.nn.sigmoid(gates)
        i = zs[:, 0 * H:1 * H]
        f = zs[:, 1 * H:2 * H]
        g = 2.0 * zs[:, 2 * H:3 * H] - 1.0
        o = zs[:, 3 * H:4 * H]
        c_new = f * c + i * g
        h_new = o * (2.0 * jax.nn.sigmoid(2.0 * c_new) - 1.0)   # tanh via one (B,H) sigmoid
        return (h_new, c_new)

    h0 = jnp.zeros((B, H), jnp.float32)
    c0 = jnp.zeros((B, H), jnp.float32)
    unroll = True if T <= 16 else 8
    h_last, _ = jax.lax.fori_loop(0, T, step, (h0, c0), unroll=unroll)

    # out[:, -1, :] -> dropout (identity in eval) -> linear, fused; lane-dense (B, Cp) store.
    out_ref[...] = (
        jnp.dot(h_last, wl_ref[...], preferred_element_type=jnp.float32) + bl_ref[...]
    ).astype(out_ref.dtype)


def lstmnet_forward(tokens, emb, wih4, whh4, b4, wl_t, bl):
    """tokens: (B, T) int32.  Weights in gate-fused, pre-transposed layout:
    wih4 (D, 4H), whh4 (H, 4H), b4 (1, 4H) = b_ih + b_hh, wl_t (H, C), bl (1, C)."""
    B, T = tokens.shape
    H = whh4.shape[0]
    C = wl_t.shape[1]

    # ---- Offline weight prep (all parameters are frozen; cached once in a real deployment). ----
    # Fold the frozen embedding through W_ih and the bias: one (V, 4H) lookup table.
    table = jnp.dot(emb.astype(jnp.float32), wih4, precision=HIGHEST) + b4       # (V, 4H)
    # Pre-scale g-gate columns by 2 so tanh(z) = 2*sigmoid(2z) - 1 reuses the sigmoid pass.
    gscale = jnp.concatenate(
        [jnp.ones((1, 2 * H)), jnp.full((1, H), 2.0), jnp.ones((1, H))], axis=1
    ).astype(jnp.float32)
    table = table * gscale
    whh_s = (whh4 * gscale).astype(jnp.float32)
    # Lane-pad the classifier so the final out_ref store is an unmasked vst.
    C_pad = max(((C + 127) // 128) * 128, 128)
    wl_p = jnp.pad(wl_t.astype(jnp.float32), ((0, 0), (0, C_pad - C)))
    bl_p = jnp.pad(bl.astype(jnp.float32), ((0, 0), (0, C_pad - C)))

    # ---- Per-call preprocessing: int32 token transpose + fused-table gather (time-major). ----
    B_pad = ((B + 7) // 8) * 8
    tok_tm = jnp.transpose(tokens)                              # (T, B), 4-byte rows only
    if B_pad != B:
        tok_tm = jnp.pad(tok_tm, ((0, 0), (0, B_pad - B)))      # padded rows sliced off below
    xg = jnp.take(table, tok_tm.reshape(-1), axis=0)            # (T*B_pad, 4H)

    vmem = pl.BlockSpec(memory_space=pltpu.MemorySpace.VMEM)
    out = pl.pallas_call(
        lstm_kernel,
        out_shape=jax.ShapeDtypeStruct((B_pad, C_pad), jnp.float32),
        in_specs=[vmem, vmem, vmem, vmem],
        out_specs=vmem,
    )(xg, whh_s, wl_p, bl_p)
    return out[:B, :C]


def reference(tokens, emb, wih4, whh4, b4, wl_t, bl):
    """Pure-JAX reference matching PyTorch LSTM semantics (zero initial state, eval dropout)."""
    seq = jnp.take(emb, tokens, axis=0)   # (B, T, D)
    B = seq.shape[0]
    H = whh4.shape[0]

    def step(carry, x_t):
        h, c = carry
        gates = (jnp.dot(x_t, wih4, precision=HIGHEST)
                 + jnp.dot(h, whh4, precision=HIGHEST) + b4)
        i = jax.nn.sigmoid(gates[:, 0 * H:1 * H])
        f = jax.nn.sigmoid(gates[:, 1 * H:2 * H])
        g = jnp.tanh(gates[:, 2 * H:3 * H])
        o = jax.nn.sigmoid(gates[:, 3 * H:4 * H])
        c = f * c + i * g
        h = o * jnp.tanh(c)
        return (h, c), None

    h0 = jnp.zeros((B, H), jnp.float32)
    c0 = jnp.zeros((B, H), jnp.float32)
    (h, _), _ = jax.lax.scan(step, (h0, c0), jnp.transpose(seq, (1, 0, 2)))
    return jnp.dot(h, wl_t, precision=HIGHEST) + bl


if __name__ == "__main__":
    B, T, V, D, H, C = 2, 8, 32, 16, 32, 4   # batch, seq, vocab, emb/input, hidden, classes

    key = jax.random.PRNGKey(0)
    k1, k2, k3, k4, k5, k6 = jax.random.split(key, 6)
    tokens = jax.random.randint(k1, (B, T), 0, V, dtype=jnp.int32)
    emb  = jax.random.normal(k2, (V, D), jnp.float32) * 0.5       # frozen pretrained embeddings
    wih4 = jax.random.normal(k3, (D, 4 * H), jnp.float32) * 0.1   # gate-stacked [i,f,g,o], (D,4H)
    whh4 = jax.random.normal(k4, (H, 4 * H), jnp.float32) * 0.1   # gate-stacked [i,f,g,o], (H,4H)
    b4   = jax.random.normal(k5, (1, 4 * H), jnp.float32) * 0.1   # b_ih + b_hh combined
    wl_t = jax.random.normal(k6, (H, C), jnp.float32) * 0.1       # classifier weight^T
    bl   = jnp.zeros((1, C), jnp.float32)

    out = jax.block_until_ready(lstmnet_forward(tokens, emb, wih4, whh4, b4, wl_t, bl))
    ref = reference(tokens, emb, wih4, whh4, b4, wl_t, bl)
    assert out.shape == (B, C)
    assert jnp.allclose(out, ref, atol=1e-5, rtol=1e-5), (out, ref)
    print("KERNEL_OK")
</pallas_src>

<mosaic_0001>
module attributes {stable_mosaic.version = 11 : i64} {
  func.func @lstm_kernel(%arg0: memref<64x128xf32, #tpu.memory_space<vmem>>, %arg1: memref<32x128xf32, #tpu.memory_space<vmem>>, %arg2: memref<32x128xf32, #tpu.memory_space<vmem>>, %arg3: memref<1x128xf32, #tpu.memory_space<vmem>>, %arg4: memref<8x128xf32, #tpu.memory_space<vmem>>) attributes {dimension_semantics = [], scalar_prefetch = 0 : i64, scratch_operands = 0 : i64, tpu.core_type = #tpu.core_type<tc>} {
    %c0 = arith.constant 0 : index
    %c0_0 = arith.constant 0 : index
    %0 = vector.load %arg1[%c0, %c0_0] : memref<32x128xf32, #tpu.memory_space<vmem>>, vector<32x128xf32>
    %cst = arith.constant 0.000000e+00 : f32
    %1 = vector.broadcast %cst : f32 to vector<8x32xf32>
    %cst_1 = arith.constant 0.000000e+00 : f32
    %2 = vector.broadcast %cst_1 : f32 to vector<8x32xf32>
    %c0_i32 = arith.constant 0 : i32
    %c8_i32 = arith.constant 8 : i32
    %3 = arith.muli %c0_i32, %c8_i32 : i32
    %4 = tpu.assume_multiple %3, 8 : i32
    %5 = arith.index_cast %4 : i32 to index
    %c0_2 = arith.constant 0 : index
    %6 = vector.load %arg0[%5, %c0_2] : memref<64x128xf32, #tpu.memory_space<vmem>>, vector<8x128xf32>
    %cst_3 = arith.constant dense<0.000000e+00> : vector<8x128xf32>
    %7 = tpu.matmul %1, %0, %cst_3 {dimension_numbers = #tpu.dot_dimension_numbers<[1], [0], [0], [1], [0, 0, 1, 1], [], []>} : vector<8x32xf32>, vector<32x128xf32>, vector<8x128xf32> -> vector<8x128xf32>
    %8 = arith.addf %6, %7 : vector<8x128xf32>
    %9 = arith.negf %8 : vector<8x128xf32>
    %10 = math.exp %9 : vector<8x128xf32>
    %cst_4 = arith.constant 1.000000e+00 : f32
    %11 = vector.broadcast %cst_4 : f32 to vector<8x128xf32>
    %12 = arith.addf %11, %10 : vector<8x128xf32>
    %13 = arith.divf %11, %12 : vector<8x128xf32>
    %14 = vector.extract_strided_slice %13 {offsets = [0, 0], sizes = [8, 32], strides = [1, 1]} : vector<8x128xf32> to vector<8x32xf32>
    %15 = vector.extract_strided_slice %13 {offsets = [0, 32], sizes = [8, 32], strides = [1, 1]} : vector<8x128xf32> to vector<8x32xf32>
    %16 = vector.extract_strided_slice %13 {offsets = [0, 64], sizes = [8, 32], strides = [1, 1]} : vector<8x128xf32> to vector<8x32xf32>
    %cst_5 = arith.constant 2.000000e+00 : f32
    %17 = vector.broadcast %cst_5 : f32 to vector<8x32xf32>
    %18 = arith.mulf %17, %16 : vector<8x32xf32>
    %cst_6 = arith.constant 1.000000e+00 : f32
    %19 = vector.broadcast %cst_6 : f32 to vector<8x32xf32>
    %20 = arith.subf %18, %19 : vector<8x32xf32>
    %21 = vector.extract_strided_slice %13 {offsets = [0, 96], sizes = [8, 32], strides = [1, 1]} : vector<8x128xf32> to vector<8x32xf32>
    %22 = arith.mulf %15, %2 : vector<8x32xf32>
    %23 = arith.mulf %14, %20 : vector<8x32xf32>
    %24 = arith.addf %22, %23 : vector<8x32xf32>
    %cst_7 = arith.constant 2.000000e+00 : f32
    %25 = vector.broadcast %cst_7 : f32 to vector<8x32xf32>
    %26 = arith.mulf %25, %24 : vector<8x32xf32>
    %27 = arith.negf %26 : vector<8x32xf32>
    %28 = math.exp %27 : vector<8x32xf32>
    %cst_8 = arith.constant 1.000000e+00 : f32
    %29 = vector.broadcast %cst_8 : f32 to vector<8x32xf32>
    %30 = arith.addf %29, %28 : vector<8x32xf32>
    %31 = arith.divf %29, %30 : vector<8x32xf32>
    %cst_9 = arith.constant 2.000000e+00 : f32
    %32 = vector.broadcast %cst_9 : f32 to vector<8x32xf32>
    %33 = arith.mulf %32, %31 : vector<8x32xf32>
    %cst_10 = arith.constant 1.000000e+00 : f32
    %34 = vector.broadcast %cst_10 : f32 to vector<8x32xf32>
    %35 = arith.subf %33, %34 : vector<8x32xf32>
    %36 = arith.mulf %21, %35 : vector<8x32xf32>
    %c1_i32 = arith.constant 1 : i32
    %c8_i32_11 = arith.constant 8 : i32
    %37 = arith.muli %c1_i32, %c8_i32_11 : i32
    %38 = tpu.assume_multiple %37, 8 : i32
    %39 = arith.index_cast %38 : i32 to index
    %c0_12 = arith.constant 0 : index
    %40 = vector.load %arg0[%39, %c0_12] : memref<64x128xf32, #tpu.memory_space<vmem>>, vector<8x128xf32>
    %cst_13 = arith.constant dense<0.000000e+00> : vector<8x128xf32>
    %41 = tpu.matmul %36, %0, %cst_13 {dimension_numbers = #tpu.dot_dimension_numbers<[1], [0], [0], [1], [0, 0, 1, 1], [], []>} : vector<8x32xf32>, vector<32x128xf32>, vector<8x128xf32> -> vector<8x128xf32>
    %42 = arith.addf %40, %41 : vector<8x128xf32>
    %43 = arith.negf %42 : vector<8x128xf32>
    %44 = math.exp %43 : vector<8x128xf32>
    %cst_14 = arith.constant 1.000000e+00 : f32
    %45 = vector.broadcast %cst_14 : f32 to vector<8x128xf32>
    %46 = arith.addf %45, %44 : vector<8x128xf32>
    %47 = arith.divf %45, %46 : vector<8x128xf32>
    %48 = vector.extract_strided_slice %47 {offsets = [0, 0], sizes = [8, 32], strides = [1, 1]} : vector<8x128xf32> to vector<8x32xf32>
    %49 = vector.extract_strided_slice %47 {offsets = [0, 32], sizes = [8, 32], strides = [1, 1]} : vector<8x128xf32> to vector<8x32xf32>
    %50 = vector.extract_strided_slice %47 {offsets = [0, 64], sizes = [8, 32], strides = [1, 1]} : vector<8x128xf32> to vector<8x32xf32>
    %cst_15 = arith.constant 2.000000e+00 : f32
    %51 = vector.broadcast %cst_15 : f32 to vector<8x32xf32>
    %52 = arith.mulf %51, %50 : vector<8x32xf32>
    %cst_16 = arith.constant 1.000000e+00 : f32
    %53 = vector.broadcast %cst_16 : f32 to vector<8x32xf32>
    %54 = arith.subf %52, %53 : vector<8x32xf32>
    %55 = vector.extract_strided_slice %47 {offsets = [0, 96], sizes = [8, 32], strides = [1, 1]} : vector<8x128xf32> to vector<8x32xf32>
    %56 = arith.mulf %49, %24 : vector<8x32xf32>
    %57 = arith.mulf %48, %54 : vector<8x32xf32>
    %58 = arith.addf %56, %57 : vector<8x32xf32>
    %cst_17 = arith.constant 2.000000e+00 : f32
    %59 = vector.broadcast %cst_17 : f32 to vector<8x32xf32>
    %60 = arith.mulf %59, %58 : vector<8x32xf32>
    %61 = arith.negf %60 : vector<8x32xf32>
    %62 = math.exp %61 : vector<8x32xf32>
    %cst_18 = arith.constant 1.000000e+00 : f32
    %63 = vector.broadcast %cst_18 : f32 to vector<8x32xf32>
    %64 = arith.addf %63, %62 : vector<8x32xf32>
    %65 = arith.divf %63, %64 : vector<8x32xf32>
    %cst_19 = arith.constant 2.000000e+00 : f32
    %66 = vector.broadcast %cst_19 : f32 to vector<8x32xf32>
    %67 = arith.mulf %66, %65 : vector<8x32xf32>
    %cst_20 = arith.constant 1.000000e+00 : f32
    %68 = vector.broadcast %cst_20 : f32 to vector<8x32xf32>
    %69 = arith.subf %67, %68 : vector<8x32xf32>
    %70 = arith.mulf %55, %69 : vector<8x32xf32>
    %c2_i32 = arith.constant 2 : i32
    %c8_i32_21 = arith.constant 8 : i32
    %71 = arith.muli %c2_i32, %c8_i32_21 : i32
    %72 = tpu.assume_multiple %71, 8 : i32
    %73 = arith.index_cast %72 : i32 to index
    %c0_22 = arith.constant 0 : index
    %74 = vector.load %arg0[%73, %c0_22] : memref<64x128xf32, #tpu.memory_space<vmem>>, vector<8x128xf32>
    %cst_23 = arith.constant dense<0.000000e+00> : vector<8x128xf32>
    %75 = tpu.matmul %70, %0, %cst_23 {dimension_numbers = #tpu.dot_dimension_numbers<[1], [0], [0], [1], [0, 0, 1, 1], [], []>} : vector<8x32xf32>, vector<32x128xf32>, vector<8x128xf32> -> vector<8x128xf32>
    %76 = arith.addf %74, %75 : vector<8x128xf32>
    %77 = arith.negf %76 : vector<8x128xf32>
    %78 = math.exp %77 : vector<8x128xf32>
    %cst_24 = arith.constant 1.000000e+00 : f32
    %79 = vector.broadcast %cst_24 : f32 to vector<8x128xf32>
    %80 = arith.addf %79, %78 : vector<8x128xf32>
    %81 = arith.divf %79, %80 : vector<8x128xf32>
    %82 = vector.extract_strided_slice %81 {offsets = [0, 0], sizes = [8, 32], strides = [1, 1]} : vector<8x128xf32> to vector<8x32xf32>
    %83 = vector.extract_strided_slice %81 {offsets = [0, 32], sizes = [8, 32], strides = [1, 1]} : vector<8x128xf32> to vector<8x32xf32>
    %84 = vector.extract_strided_slice %81 {offsets = [0, 64], sizes = [8, 32], strides = [1, 1]} : vector<8x128xf32> to vector<8x32xf32>
    %cst_25 = arith.constant 2.000000e+00 : f32
    %85 = vector.broadcast %cst_25 : f32 to vector<8x32xf32>
    %86 = arith.mulf %85, %84 : vector<8x32xf32>
    %cst_26 = arith.constant 1.000000e+00 : f32
    %87 = vector.broadcast %cst_26 : f32 to vector<8x32xf32>
    %88 = arith.subf %86, %87 : vector<8x32xf32>
    %89 = vector.extract_strided_slice %81 {offsets = [0, 96], sizes = [8, 32], strides = [1, 1]} : vector<8x128xf32> to vector<8x32xf32>
    %90 = arith.mulf %83, %58 : vector<8x32xf32>
    %91 = arith.mulf %82, %88 : vector<8x32xf32>
    %92 = arith.addf %90, %91 : vector<8x32xf32>
    %cst_27 = arith.constant 2.000000e+00 : f32
    %93 = vector.broadcast %cst_27 : f32 to vector<8x32xf32>
    %94 = arith.mulf %93, %92 : vector<8x32xf32>
    %95 = arith.negf %94 : vector<8x32xf32>
    %96 = math.exp %95 : vector<8x32xf32>
    %cst_28 = arith.constant 1.000000e+00 : f32
    %97 = vector.broadcast %cst_28 : f32 to vector<8x32xf32>
    %98 = arith.addf %97, %96 : vector<8x32xf32>
    %99 = arith.divf %97, %98 : vector<8x32xf32>
    %cst_29 = arith.constant 2.000000e+00 : f32
    %100 = vector.broadcast %cst_29 : f32 to vector<8x32xf32>
    %101 = arith.mulf %100, %99 : vector<8x32xf32>
    %cst_30 = arith.constant 1.000000e+00 : f32
    %102 = vector.broadcast %cst_30 : f32 to vector<8x32xf32>
    %103 = arith.subf %101, %102 : vector<8x32xf32>
    %104 = arith.mulf %89, %103 : vector<8x32xf32>
    %c3_i32 = arith.constant 3 : i32
    %c8_i32_31 = arith.constant 8 : i32
    %105 = arith.muli %c3_i32, %c8_i32_31 : i32
    %106 = tpu.assume_multiple %105, 8 : i32
    %107 = arith.index_cast %106 : i32 to index
    %c0_32 = arith.constant 0 : index
    %108 = vector.load %arg0[%107, %c0_32] : memref<64x128xf32, #tpu.memory_space<vmem>>, vector<8x128xf32>
    %cst_33 = arith.constant dense<0.000000e+00> : vector<8x128xf32>
    %109 = tpu.matmul %104, %0, %cst_33 {dimension_numbers = #tpu.dot_dimension_numbers<[1], [0], [0], [1], [0, 0, 1, 1], [], []>} : vector<8x32xf32>, vector<32x128xf32>, vector<8x128xf32> -> vector<8x128xf32>
    %110 = arith.addf %108, %109 : vector<8x128xf32>
    %111 = arith.negf %110 : vector<8x128xf32>
    %112 = math.exp %111 : vector<8x128xf32>
    %cst_34 = arith.constant 1.000000e+00 : f32
    %113 = vector.broadcast %cst_34 : f32 to vector<8x128xf32>
    %114 = arith.addf %113, %112 : vector<8x128xf32>
    %115 = arith.divf %113, %114 : vector<8x128xf32>
    %116 = vector.extract_strided_slice %115 {offsets = [0, 0], sizes = [8, 32], strides = [1, 1]} : vector<8x128xf32> to vector<8x32xf32>
    %117 = vector.extract_strided_slice %115 {offsets = [0, 32], sizes = [8, 32], strides = [1, 1]} : vector<8x128xf32> to vector<8x32xf32>
    %118 = vector.extract_strided_slice %115 {offsets = [0, 64], sizes = [8, 32], strides = [1, 1]} : vector<8x128xf32> to vector<8x32xf32>
    %cst_35 = arith.constant 2.000000e+00 : f32
    %119 = vector.broadcast %cst_35 : f32 to vector<8x32xf32>
    %120 = arith.mulf %119, %118 : vector<8x32xf32>
    %cst_36 = arith.constant 1.000000e+00 : f32
    %121 = vector.broadcast %cst_36 : f32 to vector<8x32xf32>
    %122 = arith.subf %120, %121 : vector<8x32xf32>
    %123 = vector.extract_strided_slice %115 {offsets = [0, 96], sizes = [8, 32], strides = [1, 1]} : vector<8x128xf32> to vector<8x32xf32>
    %124 = arith.mulf %117, %92 : vector<8x32xf32>
    %125 = arith.mulf %116, %122 : vector<8x32xf32>
    %126 = arith.addf %124, %125 : vector<8x32xf32>
    %cst_37 = arith.constant 2.000000e+00 : f32
    %127 = vector.broadcast %cst_37 : f32 to vector<8x32xf32>
    %128 = arith.mulf %127, %126 : vector<8x32xf32>
    %129 = arith.negf %128 : vector<8x32xf32>
    %130 = math.exp %129 : vector<8x32xf32>
    %cst_38 = arith.constant 1.000000e+00 : f32
    %131 = vector.broadcast %cst_38 : f32 to vector<8x32xf32>
    %132 = arith.addf %131, %130 : vector<8x32xf32>
    %133 = arith.divf %131, %132 : vector<8x32xf32>
    %cst_39 = arith.constant 2.000000e+00 : f32
    %134 = vector.broadcast %cst_39 : f32 to vector<8x32xf32>
    %135 = arith.mulf %134, %133 : vector<8x32xf32>
    %cst_40 = arith.constant 1.000000e+00 : f32
    %136 = vector.broadcast %cst_40 : f32 to vector<8x32xf32>
    %137 = arith.subf %135, %136 : vector<8x32xf32>
    %138 = arith.mulf %123, %137 : vector<8x32xf32>
    %c4_i32 = arith.constant 4 : i32
    %c8_i32_41 = arith.constant 8 : i32
    %139 = arith.muli %c4_i32, %c8_i32_41 : i32
    %140 = tpu.assume_multiple %139, 8 : i32
    %141 = arith.index_cast %140 : i32 to index
    %c0_42 = arith.constant 0 : index
    %142 = vector.load %arg0[%141, %c0_42] : memref<64x128xf32, #tpu.memory_space<vmem>>, vector<8x128xf32>
    %cst_43 = arith.constant dense<0.000000e+00> : vector<8x128xf32>
    %143 = tpu.matmul %138, %0, %cst_43 {dimension_numbers = #tpu.dot_dimension_numbers<[1], [0], [0], [1], [0, 0, 1, 1], [], []>} : vector<8x32xf32>, vector<32x128xf32>, vector<8x128xf32> -> vector<8x128xf32>
    %144 = arith.addf %142, %143 : vector<8x128xf32>
    %145 = arith.negf %144 : vector<8x128xf32>
    %146 = math.exp %145 : vector<8x128xf32>
    %cst_44 = arith.constant 1.000000e+00 : f32
    %147 = vector.broadcast %cst_44 : f32 to vector<8x128xf32>
    %148 = arith.addf %147, %146 : vector<8x128xf32>
    %149 = arith.divf %147, %148 : vector<8x128xf32>
    %150 = vector.extract_strided_slice %149 {offsets = [0, 0], sizes = [8, 32], strides = [1, 1]} : vector<8x128xf32> to vector<8x32xf32>
    %151 = vector.extract_strided_slice %149 {offsets = [0, 32], sizes = [8, 32], strides = [1, 1]} : vector<8x128xf32> to vector<8x32xf32>
    %152 = vector.extract_strided_slice %149 {offsets = [0, 64], sizes = [8, 32], strides = [1, 1]} : vector<8x128xf32> to vector<8x32xf32>
    %cst_45 = arith.constant 2.000000e+00 : f32
    %153 = vector.broadcast %cst_45 : f32 to vector<8x32xf32>
    %154 = arith.mulf %153, %152 : vector<8x32xf32>
    %cst_46 = arith.constant 1.000000e+00 : f32
    %155 = vector.broadcast %cst_46 : f32 to vector<8x32xf32>
    %156 = arith.subf %154, %155 : vector<8x32xf32>
    %157 = vector.extract_strided_slice %149 {offsets = [0, 96], sizes = [8, 32], strides = [1, 1]} : vector<8x128xf32> to vector<8x32xf32>
    %158 = arith.mulf %151, %126 : vector<8x32xf32>
    %159 = arith.mulf %150, %156 : vector<8x32xf32>
    %160 = arith.addf %158, %159 : vector<8x32xf32>
    %cst_47 = arith.constant 2.000000e+00 : f32
    %161 = vector.broadcast %cst_47 : f32 to vector<8x32xf32>
    %162 = arith.mulf %161, %160 : vector<8x32xf32>
    %163 = arith.negf %162 : vector<8x32xf32>
    %164 = math.exp %163 : vector<8x32xf32>
    %cst_48 = arith.constant 1.000000e+00 : f32
    %165 = vector.broadcast %cst_48 : f32 to vector<8x32xf32>
    %166 = arith.addf %165, %164 : vector<8x32xf32>
    %167 = arith.divf %165, %166 : vector<8x32xf32>
    %cst_49 = arith.constant 2.000000e+00 : f32
    %168 = vector.broadcast %cst_49 : f32 to vector<8x32xf32>
    %169 = arith.mulf %168, %167 : vector<8x32xf32>
    %cst_50 = arith.constant 1.000000e+00 : f32
    %170 = vector.broadcast %cst_50 : f32 to vector<8x32xf32>
    %171 = arith.subf %169, %170 : vector<8x32xf32>
    %172 = arith.mulf %157, %171 : vector<8x32xf32>
    %c5_i32 = arith.constant 5 : i32
    %c8_i32_51 = arith.constant 8 : i32
    %173 = arith.muli %c5_i32, %c8_i32_51 : i32
    %174 = tpu.assume_multiple %173, 8 : i32
    %175 = arith.index_cast %174 : i32 to index
    %c0_52 = arith.constant 0 : index
    %176 = vector.load %arg0[%175, %c0_52] : memref<64x128xf32, #tpu.memory_space<vmem>>, vector<8x128xf32>
    %cst_53 = arith.constant dense<0.000000e+00> : vector<8x128xf32>
    %177 = tpu.matmul %172, %0, %cst_53 {dimension_numbers = #tpu.dot_dimension_numbers<[1], [0], [0], [1], [0, 0, 1, 1], [], []>} : vector<8x32xf32>, vector<32x128xf32>, vector<8x128xf32> -> vector<8x128xf32>
    %178 = arith.addf %176, %177 : vector<8x128xf32>
    %179 = arith.negf %178 : vector<8x128xf32>
    %180 = math.exp %179 : vector<8x128xf32>
    %cst_54 = arith.constant 1.000000e+00 : f32
    %181 = vector.broadcast %cst_54 : f32 to vector<8x128xf32>
    %182 = arith.addf %181, %180 : vector<8x128xf32>
    %183 = arith.divf %181, %182 : vector<8x128xf32>
    %184 = vector.extract_strided_slice %183 {offsets = [0, 0], sizes = [8, 32], strides = [1, 1]} : vector<8x128xf32> to vector<8x32xf32>
    %185 = vector.extract_strided_slice %183 {offsets = [0, 32], sizes = [8, 32], strides = [1, 1]} : vector<8x128xf32> to vector<8x32xf32>
    %186 = vector.extract_strided_slice %183 {offsets = [0, 64], sizes = [8, 32], strides = [1, 1]} : vector<8x128xf32> to vector<8x32xf32>
    %cst_55 = arith.constant 2.000000e+00 : f32
    %187 = vector.broadcast %cst_55 : f32 to vector<8x32xf32>
    %188 = arith.mulf %187, %186 : vector<8x32xf32>
    %cst_56 = arith.constant 1.000000e+00 : f32
    %189 = vector.broadcast %cst_56 : f32 to vector<8x32xf32>
    %190 = arith.subf %188, %189 : vector<8x32xf32>
    %191 = vector.extract_strided_slice %183 {offsets = [0, 96], sizes = [8, 32], strides = [1, 1]} : vector<8x128xf32> to vector<8x32xf32>
    %192 = arith.mulf %185, %160 : vector<8x32xf32>
    %193 = arith.mulf %184, %190 : vector<8x32xf32>
    %194 = arith.addf %192, %193 : vector<8x32xf32>
    %cst_57 = arith.constant 2.000000e+00 : f32
    %195 = vector.broadcast %cst_57 : f32 to vector<8x32xf32>
    %196 = arith.mulf %195, %194 : vector<8x32xf32>
    %197 = arith.negf %196 : vector<8x32xf32>
    %198 = math.exp %197 : vector<8x32xf32>
    %cst_58 = arith.constant 1.000000e+00 : f32
    %199 = vector.broadcast %cst_58 : f32 to vector<8x32xf32>
    %200 = arith.addf %199, %198 : vector<8x32xf32>
    %201 = arith.divf %199, %200 : vector<8x32xf32>
    %cst_59 = arith.constant 2.000000e+00 : f32
    %202 = vector.broadcast %cst_59 : f32 to vector<8x32xf32>
    %203 = arith.mulf %202, %201 : vector<8x32xf32>
    %cst_60 = arith.constant 1.000000e+00 : f32
    %204 = vector.broadcast %cst_60 : f32 to vector<8x32xf32>
    %205 = arith.subf %203, %204 : vector<8x32xf32>
    %206 = arith.mulf %191, %205 : vector<8x32xf32>
    %c6_i32 = arith.constant 6 : i32
    %c8_i32_61 = arith.constant 8 : i32
    %207 = arith.muli %c6_i32, %c8_i32_61 : i32
    %208 = tpu.assume_multiple %207, 8 : i32
    %209 = arith.index_cast %208 : i32 to index
    %c0_62 = arith.constant 0 : index
    %210 = vector.load %arg0[%209, %c0_62] : memref<64x128xf32, #tpu.memory_space<vmem>>, vector<8x128xf32>
    %cst_63 = arith.constant dense<0.000000e+00> : vector<8x128xf32>
    %211 = tpu.matmul %206, %0, %cst_63 {dimension_numbers = #tpu.dot_dimension_numbers<[1], [0], [0], [1], [0, 0, 1, 1], [], []>} : vector<8x32xf32>, vector<32x128xf32>, vector<8x128xf32> -> vector<8x128xf32>
    %212 = arith.addf %210, %211 : vector<8x128xf32>
    %213 = arith.negf %212 : vector<8x128xf32>
    %214 = math.exp %213 : vector<8x128xf32>
    %cst_64 = arith.constant 1.000000e+00 : f32
    %215 = vector.broadcast %cst_64 : f32 to vector<8x128xf32>
    %216 = arith.addf %215, %214 : vector<8x128xf32>
    %217 = arith.divf %215, %216 : vector<8x128xf32>
    %218 = vector.extract_strided_slice %217 {offsets = [0, 0], sizes = [8, 32], strides = [1, 1]} : vector<8x128xf32> to vector<8x32xf32>
    %219 = vector.extract_strided_slice %217 {offsets = [0, 32], sizes = [8, 32], strides = [1, 1]} : vector<8x128xf32> to vector<8x32xf32>
    %220 = vector.extract_strided_slice %217 {offsets = [0, 64], sizes = [8, 32], strides = [1, 1]} : vector<8x128xf32> to vector<8x32xf32>
    %cst_65 = arith.constant 2.000000e+00 : f32
    %221 = vector.broadcast %cst_65 : f32 to vector<8x32xf32>
    %222 = arith.mulf %221, %220 : vector<8x32xf32>
    %cst_66 = arith.constant 1.000000e+00 : f32
    %223 = vector.broadcast %cst_66 : f32 to vector<8x32xf32>
    %224 = arith.subf %222, %223 : vector<8x32xf32>
    %225 = vector.extract_strided_slice %217 {offsets = [0, 96], sizes = [8, 32], strides = [1, 1]} : vector<8x128xf32> to vector<8x32xf32>
    %226 = arith.mulf %219, %194 : vector<8x32xf32>
    %227 = arith.mulf %218, %224 : vector<8x32xf32>
    %228 = arith.addf %226, %227 : vector<8x32xf32>
    %cst_67 = arith.constant 2.000000e+00 : f32
    %229 = vector.broadcast %cst_67 : f32 to vector<8x32xf32>
    %230 = arith.mulf %229, %228 : vector<8x32xf32>
    %231 = arith.negf %230 : vector<8x32xf32>
    %232 = math.exp %231 : vector<8x32xf32>
    %cst_68 = arith.constant 1.000000e+00 : f32
    %233 = vector.broadcast %cst_68 : f32 to vector<8x32xf32>
    %234 = arith.addf %233, %232 : vector<8x32xf32>
    %235 = arith.divf %233, %234 : vector<8x32xf32>
    %cst_69 = arith.constant 2.000000e+00 : f32
    %236 = vector.broadcast %cst_69 : f32 to vector<8x32xf32>
    %237 = arith.mulf %236, %235 : vector<8x32xf32>
    %cst_70 = arith.constant 1.000000e+00 : f32
    %238 = vector.broadcast %cst_70 : f32 to vector<8x32xf32>
    %239 = arith.subf %237, %238 : vector<8x32xf32>
    %240 = arith.mulf %225, %239 : vector<8x32xf32>
    %c7_i32 = arith.constant 7 : i32
    %c8_i32_71 = arith.constant 8 : i32
    %241 = arith.muli %c7_i32, %c8_i32_71 : i32
    %242 = tpu.assume_multiple %241, 8 : i32
    %243 = arith.index_cast %242 : i32 to index
    %c0_72 = arith.constant 0 : index
    %244 = vector.load %arg0[%243, %c0_72] : memref<64x128xf32, #tpu.memory_space<vmem>>, vector<8x128xf32>
    %cst_73 = arith.constant dense<0.000000e+00> : vector<8x128xf32>
    %245 = tpu.matmul %240, %0, %cst_73 {dimension_numbers = #tpu.dot_dimension_numbers<[1], [0], [0], [1], [0, 0, 1, 1], [], []>} : vector<8x32xf32>, vector<32x128xf32>, vector<8x128xf32> -> vector<8x128xf32>
    %246 = arith.addf %244, %245 : vector<8x128xf32>
    %247 = arith.negf %246 : vector<8x128xf32>
    %248 = math.exp %247 : vector<8x128xf32>
    %cst_74 = arith.constant 1.000000e+00 : f32
    %249 = vector.broadcast %cst_74 : f32 to vector<8x128xf32>
    %250 = arith.addf %249, %248 : vector<8x128xf32>
    %251 = arith.divf %249, %250 : vector<8x128xf32>
    %252 = vector.extract_strided_slice %251 {offsets = [0, 0], sizes = [8, 32], strides = [1, 1]} : vector<8x128xf32> to vector<8x32xf32>
    %253 = vector.extract_strided_slice %251 {offsets = [0, 32], sizes = [8, 32], strides = [1, 1]} : vector<8x128xf32> to vector<8x32xf32>
    %254 = vector.extract_strided_slice %251 {offsets = [0, 64], sizes = [8, 32], strides = [1, 1]} : vector<8x128xf32> to vector<8x32xf32>
    %cst_75 = arith.constant 2.000000e+00 : f32
    %255 = vector.broadcast %cst_75 : f32 to vector<8x32xf32>
    %256 = arith.mulf %255, %254 : vector<8x32xf32>
    %cst_76 = arith.constant 1.000000e+00 : f32
    %257 = vector.broadcast %cst_76 : f32 to vector<8x32xf32>
    %258 = arith.subf %256, %257 : vector<8x32xf32>
    %259 = vector.extract_strided_slice %251 {offsets = [0, 96], sizes = [8, 32], strides = [1, 1]} : vector<8x128xf32> to vector<8x32xf32>
    %260 = arith.mulf %253, %228 : vector<8x32xf32>
    %261 = arith.mulf %252, %258 : vector<8x32xf32>
    %262 = arith.addf %260, %261 : vector<8x32xf32>
    %cst_77 = arith.constant 2.000000e+00 : f32
    %263 = vector.broadcast %cst_77 : f32 to vector<8x32xf32>
    %264 = arith.mulf %263, %262 : vector<8x32xf32>
    %265 = arith.negf %264 : vector<8x32xf32>
    %266 = math.exp %265 : vector<8x32xf32>
    %cst_78 = arith.constant 1.000000e+00 : f32
    %267 = vector.broadcast %cst_78 : f32 to vector<8x32xf32>
    %268 = arith.addf %267, %266 : vector<8x32xf32>
    %269 = arith.divf %267, %268 : vector<8x32xf32>
    %cst_79 = arith.constant 2.000000e+00 : f32
    %270 = vector.broadcast %cst_79 : f32 to vector<8x32xf32>
    %271 = arith.mulf %270, %269 : vector<8x32xf32>
    %cst_80 = arith.constant 1.000000e+00 : f32
    %272 = vector.broadcast %cst_80 : f32 to vector<8x32xf32>
    %273 = arith.subf %271, %272 : vector<8x32xf32>
    %274 = arith.mulf %259, %273 : vector<8x32xf32>
    %c8_i32_81 = arith.constant 8 : i32
    %c0_82 = arith.constant 0 : index
    %c0_83 = arith.constant 0 : index
    %275 = vector.load %arg2[%c0_82, %c0_83] : memref<32x128xf32, #tpu.memory_space<vmem>>, vector<32x128xf32>
    %cst_84 = arith.constant dense<0.000000e+00> : vector<8x128xf32>
    %276 = tpu.matmul %274, %275, %cst_84 {dimension_numbers = #tpu.dot_dimension_numbers<[1], [0], [0], [1], [0, 0, 1, 1], [], []>} : vector<8x32xf32>, vector<32x128xf32>, vector<8x128xf32> -> vector<8x128xf32>
    %c0_85 = arith.constant 0 : index
    %c0_86 = arith.constant 0 : index
    %277 = vector.load %arg3[%c0_85, %c0_86] : memref<1x128xf32, #tpu.memory_space<vmem>>, vector<1x128xf32>
    %278 = vector.broadcast %277 : vector<1x128xf32> to vector<8x128xf32>
    %279 = arith.addf %276, %278 : vector<8x128xf32>
    %c0_87 = arith.constant 0 : index
    %c0_88 = arith.constant 0 : index
    %280 = vector.load %arg4[%c0_87, %c0_88] : memref<8x128xf32, #tpu.memory_space<vmem>>, vector<8x128xf32>
    tpu.vector_store %arg4[%c0_87, %c0_88], %279 {strides = array<i32>} : memref<8x128xf32, #tpu.memory_space<vmem>>, vector<8x128xf32>,
    return
  }
}

</mosaic_0001>

<llo_original>
// kernel: tpu_custom_call.1
$region0: #{tpu_custom_call.1}
  #allocation0 [shape = 'u32[]', space=smem, size = 0x4, offset = 0x4, fixed_abs, tag = 'smem constant byte address 0x4 - core index']
  #allocation1 [shape = 'u32[144,128]{1,0:T(1,128)}', space=vmem, size = 0x12000, scoped, tag = 'internal scratch']
  %s0 = inlined_call_operand.hbm [shape: f32[64,128], index: 0, kind: input, shape index: {}]
  %s1 = inlined_call_operand.hbm [shape: f32[32,128], index: 1, kind: input, shape index: {}]
  %s2 = inlined_call_operand.hbm [shape: f32[32,128], index: 2, kind: input, shape index: {}]
  %s3 = inlined_call_operand.vmem [shape: f32[1,128], index: 3, kind: input, shape index: {}]
  %s4 = inlined_call_operand.hbm [shape: f32[8,128], index: 4, kind: output, shape index: {}]
  %s5 = sld [smem:[#allocation0]]
  $region38: #{tpu_custom_call.1} parent=0
    _
  %s7 = ssub.s32 1, %s5
  %s8 = scalar_select 0, %s7, %s5
  $region1: #{tpu_custom_call.1} parent=0
    #allocation2 [shape = 'u8[32768]{0}', space=vmem, size = 0x8000, scoped, tag = 'input window, operand 0, single buffered']
    #allocation3 [shape = 's32[1]{0}', space=sflag, size = 0x4, scoped, tag = 'scoped memory for tpu_custom_call.1']
    #allocation4 [shape = 's32[1]{0}', space=sflag, size = 0x4, scoped, tag = 'scoped memory for tpu_custom_call.1']
    #allocation5 [shape = 'u8[16384]{0}', space=vmem, size = 0x4000, scoped, tag = 'input window, operand 1, single buffered']
    #allocation6 [shape = 's32[1]{0}', space=sflag, size = 0x4, scoped, tag = 'scoped memory for tpu_custom_call.1']
    #allocation7 [shape = 'u8[16384]{0}', space=vmem, size = 0x4000, scoped, tag = 'input window, operand 2, single buffered']
    #allocation8 [shape = 'u8[4096]{0}', space=vmem, size = 0x1000, scoped, tag = 'output window, operand 0, single buffered']
    %9 = vsyncpa [#allocation3], 0
    %10 = vsyncpa [#allocation6], 0
    %11 = vsyncpa [#allocation4], 0
    // Predicated region
    $region2: #{tpu_custom_call.1} parent=1 // pred_check
      _
    $region3: #{tpu_custom_call.1} parent=1 // pred_check_branch
      %13 = sbr.rel (0) target = $region5
    $region4: #{tpu_custom_call.1} parent=1 // pred_region
      %s15 = ssub.s32 1024, 1024
      %16 = vsyncadd [#allocation3], %s15
      %s17 = sshll.u32 [#allocation2], 4
      %s18 = int_to_ptr.vmem [resolvable:$true] %s17
      %23 = dma.hbm_to_vmem [thread:$0]  %s0, 1024, %s18, [#allocation3], 128, 128, 8
    $region5: #{tpu_custom_call.1} parent=1 // pred_fallthru
      _
    // Predicated region
    $region6: #{tpu_custom_call.1} parent=1 // pred_check
      _
    $region7: #{tpu_custom_call.1} parent=1 // pred_check_branch
      %25 = sbr.rel (0) target = $region9
    $region8: #{tpu_custom_call.1} parent=1 // pred_region
      %s27 = ssub.s32 512, 512
      %28 = vsyncadd [#allocation6], %s27
      %s29 = sshll.u32 [#allocation5], 4
      %s30 = int_to_ptr.vmem [resolvable:$true] %s29
      %35 = dma.hbm_to_vmem [thread:$0]  %s1, 512, %s30, [#allocation6], 128, 128, 8
    $region9: #{tpu_custom_call.1} parent=1 // pred_fallthru
      _
    // Predicated region
    $region10: #{tpu_custom_call.1} parent=1 // pred_check
      _
    $region11: #{tpu_custom_call.1} parent=1 // pred_check_branch
      %37 = sbr.rel (0) target = $region13
    $region12: #{tpu_custom_call.1} parent=1 // pred_region
      %s39 = ssub.s32 512, 512
      %40 = vsyncadd [#allocation6], %s39
      %s41 = sshll.u32 [#allocation7], 4
      %s42 = int_to_ptr.vmem [resolvable:$true] %s41
      %47 = dma.hbm_to_vmem [thread:$0]  %s2, 512, %s42, [#allocation6], 128, 128, 8
    $region13: #{tpu_custom_call.1} parent=1 // pred_fallthru
      _
    // Predicated region
    $region14: #{tpu_custom_call.1} parent=1 // pred_check
      _
    $region15: #{tpu_custom_call.1} parent=1 // pred_check_branch
      %49 = sbr.rel (0) target = $region17
    $region16: #{tpu_custom_call.1} parent=1 // pred_region
      _
    $region17: #{tpu_custom_call.1} parent=1 // pred_fallthru
      _
    // Predicated region
    $region18: #{tpu_custom_call.1} parent=1 // pred_check
      _
    $region19: #{tpu_custom_call.1} parent=1 // pred_check_branch
      %51 = sbr.rel (0) target = $region21
    $region20: #{tpu_custom_call.1} parent=1 // pred_region
      %52 = dma.done [#allocation3], 1024
    $region21: #{tpu_custom_call.1} parent=1 // pred_fallthru
      _
    // Predicated region
    $region22: #{tpu_custom_call.1} parent=1 // pred_check
      _
    $region23: #{tpu_custom_call.1} parent=1 // pred_check_branch
      %54 = sbr.rel (0) target = $region25
    $region24: #{tpu_custom_call.1} parent=1 // pred_region
      %55 = dma.done [#allocation6], 512
    $region25: #{tpu_custom_call.1} parent=1 // pred_fallthru
      _
    // Predicated region
    $region26: #{tpu_custom_call.1} parent=1 // pred_check
      _
    $region27: #{tpu_custom_call.1} parent=1 // pred_check_branch
      %57 = sbr.rel (0) target = $region29
    $region28: #{tpu_custom_call.1} parent=1 // pred_region
      %58 = dma.done [#allocation6], 512
    $region29: #{tpu_custom_call.1} parent=1 // pred_fallthru
      _
    %v59 = vld [vmem:[#allocation5] sm:$0xff]
    %v60 = vld [vmem:[#allocation5 + $0x8] sm:$0xff]
    %v61 = vld [vmem:[#allocation5 + $0x10] sm:$0xff]
    %v62 = vld [vmem:[#allocation5 + $0x18] sm:$0xff]
    %v63 = vld [vmem:[#allocation2] sm:$0xff]
    %vm64 = vcmask 261120
    %v66 = vsel %vm64, 0.0, 0
    %68 = vmatprep.subr.mxu0 0.0
    %69 = vmatpush1.msra.mxu0 0.0
    %70 = vmatprep.subr.mxu0 0.0
    %71 = vmatpush1.msra.mxu0 0.0
    %72 = vmatprep.subr.mxu0 0.0
    %73 = vmatpush1.msra.mxu0 0.0
    %74 = vmatprep.subr.mxu0 0.0
    %75 = vmatpush1.msra.mxu0 0.0
    %76 = vmatprep.subr.mxu0 0.0
    %77 = vmatpush1.msra.mxu0 0.0
    %78 = vmatprep.subr.mxu0 0.0
    %79 = vmatpush1.msra.mxu0 0.0
    %80 = vmatprep.subr.mxu0 0.0
    %81 = vmatpush1.msra.mxu0 0.0
    %82 = vmatprep.subr.mxu0 0.0
    %83 = vmatpush1.msra.mxu0 0.0
    %84 = vmatprep.subr.mxu0 0.0
    %85 = vmatpush1.msra.mxu0 0.0
    %86 = vmatprep.subr.mxu0 0.0
    %87 = vmatpush1.msra.mxu0 0.0
    %88 = vmatprep.subr.mxu0 0.0
    %89 = vmatpush1.msra.mxu0 0.0
    %90 = vmatprep.subr.mxu0 0.0
    %91 = vmatpush1.msra.mxu0 0.0
    %92 = vmatprep.subr.mxu0 0.0
    %93 = vmatpush1.msra.mxu0 %v62
    %94 = vmatprep.subr.mxu0 0.0
    %95 = vmatpush1.msra.mxu0 %v61
    %96 = vmatprep.subr.mxu0 0.0
    %97 = vmatpush1.msra.mxu0 %v60
    %98 = vmatprep.subr.mxu0 0.0
    %99 = vmatpush1.msra.mxu0 %v59
    %100 = vmatprep.subr.mxu0 0.0
    %101 = vmatpush2.msra.mxu0 0.0
    %102 = vmatprep.subr.mxu0 0.0
    %103 = vmatpush2.msra.mxu0 0.0
    %104 = vmatprep.subr.mxu0 0.0
    %105 = vmatpush2.msra.mxu0 0.0
    %106 = vmatprep.subr.mxu0 0.0
    %107 = vmatpush2.msra.mxu0 0.0
    %108 = vmatprep.subr.mxu0 0.0
    %109 = vmatpush2.msra.mxu0 0.0
    %110 = vmatprep.subr.mxu0 0.0
    %111 = vmatpush2.msra.mxu0 0.0
    %112 = vmatprep.subr.mxu0 0.0
    %113 = vmatpush2.msra.mxu0 0.0
    %114 = vmatprep.subr.mxu0 0.0
    %115 = vmatpush2.msra.mxu0 0.0
    %116 = vmatprep.subr.mxu0 0.0
    %117 = vmatpush2.msra.mxu0 0.0
    %118 = vmatprep.subr.mxu0 0.0
    %119 = vmatpush2.msra.mxu0 0.0
    %120 = vmatprep.subr.mxu0 0.0
    %121 = vmatpush2.msra.mxu0 0.0
    %122 = vmatprep.subr.mxu0 0.0
    %123 = vmatpush2.msra.mxu0 0.0
    %124 = vmatprep.subr.mxu0 0.0
    %125 = vmatpush2.msra.mxu0 0.0
    %126 = vmatprep.subr.mxu0 0.0
    %127 = vmatpush2.msra.mxu0 0.0
    %128 = vmatprep.subr.mxu0 0.0
    %129 = vmatpush2.msra.mxu0 0.0
    %130 = vmatprep.subr.mxu0 0.0
    %131 = vmatpush2.msra.mxu0 0.0
    %132 = vmatprep.mubr.f32.mxu0 0.0
    %133 = vmatmul.mubr.f32.gmra.mxu0 %v66
    %v134 = vpop.f32.mrf.mxu0
    %v135 = vadd.f32 0.0, %v134
    %v136 = vpop.f32.mrf.mxu0
    %137 = vdwg.mxu0
    %v138 = vadd.f32 %v63, %v135
    %v139 = vxor.u32 %v138, 2147483648
    %v140 = vmul.f32 %v139, 1.442695
    %v141 = vpow.pop %v140
    %v142 = vadd.f32 %v141, 1.0
    %v143 = vrcp.pop %v142
    %v144 = vmul.f32 1.0, %v143
    %v145 = vmul.f32 %v144, 2.0
    %v146 = vsub.f32 %v145, 1.0
    %v147 = vmul.f32 %v144, 0.0
    %149 = vrot.lane.b32.xlu0 %v146, 64
    %v150 = vpop.permute.xlu0 %149
    %v152 = vmul.f32 %v144, %v150
    %154 = vrot.lane.b32.xlu0 %v152, 32
    %v155 = vpop.permute.xlu0 %154
    %v157 = vadd.f32 %v147, %v155
    %v158 = vmul.f32 %v157, 2.0
    %v159 = vxor.u32 %v158, 2147483648
    %v160 = vmul.f32 %v159, 1.442695
    %v161 = vpow.pop %v160
    %v162 = vadd.f32 %v161, 1.0
    %v163 = vrcp.pop %v162
    %v164 = vmul.f32 1.0, %v163
    %v165 = vmul.f32 %v164, 2.0
    %v166 = vsub.f32 %v165, 1.0
    %168 = vrot.lane.b32.xlu0 %v166, 64
    %v169 = vpop.permute.xlu0 %168
    %v171 = vmul.f32 %v144, %v169
    %s172 = scalar_lea.vmem [#allocation2], 8
    %v173 = vld [vmem:[%s172] sm:$0xff]
    %175 = vrot.lane.b32.xlu0 %v171, 32
    %v176 = vpop.permute.xlu0 %175
    %v177 = vsel %vm64, %v176, 0
    %179 = vmatprep.subr.mxu0 0.0
    %180 = vmatpush1.msra.mxu0 0.0
    %181 = vmatprep.subr.mxu0 0.0
    %182 = vmatpush1.msra.mxu0 0.0
    %183 = vmatprep.subr.mxu0 0.0
    %184 = vmatpush1.msra.mxu0 0.0
    %185 = vmatprep.subr.mxu0 0.0
    %186 = vmatpush1.msra.mxu0 0.0
    %187 = vmatprep.subr.mxu0 0.0
    %188 = vmatpush1.msra.mxu0 0.0
    %189 = vmatprep.subr.mxu0 0.0
    %190 = vmatpush1.msra.mxu0 0.0
    %191 = vmatprep.subr.mxu0 0.0
    %192 = vmatpush1.msra.mxu0 0.0
    %193 = vmatprep.subr.mxu0 0.0
    %194 = vmatpush1.msra.mxu0 0.0
    %195 = vmatprep.subr.mxu0 0.0
    %196 = vmatpush1.msra.mxu0 0.0
    %197 = vmatprep.subr.mxu0 0.0
    %198 = vmatpush1.msra.mxu0 0.0
    %199 = vmatprep.subr.mxu0 0.0
    %200 = vmatpush1.msra.mxu0 0.0
    %201 = vmatprep.subr.mxu0 0.0
    %202 = vmatpush1.msra.mxu0 0.0
    %203 = vmatprep.subr.mxu0 0.0
    %204 = vmatpush1.msra.mxu0 %v62
    %205 = vmatprep.subr.mxu0 0.0
    %206 = vmatpush1.msra.mxu0 %v61
    %207 = vmatprep.subr.mxu0 0.0
    %208 = vmatpush1.msra.mxu0 %v60
    %209 = vmatprep.subr.mxu0 0.0
    %210 = vmatpush1.msra.mxu0 %v59
    %211 = vmatprep.subr.mxu0 0.0
    %212 = vmatpush2.msra.mxu0 0.0
    %213 = vmatprep.subr.mxu0 0.0
    %214 = vmatpush2.msra.mxu0 0.0
    %215 = vmatprep.subr.mxu0 0.0
    %216 = vmatpush2.msra.mxu0 0.0
    %217 = vmatprep.subr.mxu0 0.0
    %218 = vmatpush2.msra.mxu0 0.0
    %219 = vmatprep.subr.mxu0 0.0
    %220 = vmatpush2.msra.mxu0 0.0
    %221 = vmatprep.subr.mxu0 0.0
    %222 = vmatpush2.msra.mxu0 0.0
    %223 = vmatprep.subr.mxu0 0.0
    %224 = vmatpush2.msra.mxu0 0.0
    %225 = vmatprep.subr.mxu0 0.0
    %226 = vmatpush2.msra.mxu0 0.0
    %227 = vmatprep.subr.mxu0 0.0
    %228 = vmatpush2.msra.mxu0 0.0
    %229 = vmatprep.subr.mxu0 0.0
    %230 = vmatpush2.msra.mxu0 0.0
    %231 = vmatprep.subr.mxu0 0.0
    %232 = vmatpush2.msra.mxu0 0.0
    %233 = vmatprep.subr.mxu0 0.0
    %234 = vmatpush2.msra.mxu0 0.0
    %235 = vmatprep.subr.mxu0 0.0
    %236 = vmatpush2.msra.mxu0 0.0
    %237 = vmatprep.subr.mxu0 0.0
    %238 = vmatpush2.msra.mxu0 0.0
    %239 = vmatprep.subr.mxu0 0.0
    %240 = vmatpush2.msra.mxu0 0.0
    %241 = vmatprep.subr.mxu0 0.0
    %242 = vmatpush2.msra.mxu0 0.0
    %243 = vmatprep.mubr.f32.mxu0 0.0
    %244 = vmatmul.mubr.f32.gmra.mxu0 %v177
    %v245 = vpop.f32.mrf.mxu0
    %v246 = vadd.f32 0.0, %v245
    %v247 = vpop.f32.mrf.mxu0
    %248 = vdwg.mxu0
    %v249 = vadd.f32 %v173, %v246
    %v250 = vxor.u32 %v249, 2147483648
    %v251 = vmul.f32 %v250, 1.442695
    %v252 = vpow.pop %v251
    %v253 = vadd.f32 %v252, 1.0
    %v254 = vrcp.pop %v253
    %v255 = vmul.f32 1.0, %v254
    %v256 = vmul.f32 %v255, 2.0
    %v257 = vsub.f32 %v256, 1.0
    %v258 = vmul.f32 %v255, %v157
    %260 = vrot.lane.b32.xlu0 %v257, 64
    %v261 = vpop.permute.xlu0 %260
    %v263 = vmul.f32 %v255, %v261
    %265 = vrot.lane.b32.xlu0 %v263, 32
    %v266 = vpop.permute.xlu0 %265
    %v268 = vadd.f32 %v258, %v266
    %v269 = vmul.f32 %v268, 2.0
    %v270 = vxor.u32 %v269, 2147483648
    %v271 = vmul.f32 %v270, 1.442695
    %v272 = vpow.pop %v271
    %v273 = vadd.f32 %v272, 1.0
    %v274 = vrcp.pop %v273
    %v275 = vmul.f32 1.0, %v274
    %v276 = vmul.f32 %v275, 2.0
    %v277 = vsub.f32 %v276, 1.0
    %279 = vrot.lane.b32.xlu0 %v277, 64
    %v280 = vpop.permute.xlu0 %279
    %v282 = vmul.f32 %v255, %v280
    %s283 = scalar_lea.vmem [#allocation2], 16
    %v284 = vld [vmem:[%s283] sm:$0xff]
    %286 = vrot.lane.b32.xlu0 %v282, 32
    %v287 = vpop.permute.xlu0 %286
    %v288 = vsel %vm64, %v287, 0
    %290 = vmatprep.subr.mxu0 0.0
    %291 = vmatpush1.msra.mxu0 0.0
    %292 = vmatprep.subr.mxu0 0.0
    %293 = vmatpush1.msra.mxu0 0.0
    %294 = vmatprep.subr.mxu0 0.0
    %295 = vmatpush1.msra.mxu0 0.0
    %296 = vmatprep.subr.mxu0 0.0
    %297 = vmatpush1.msra.mxu0 0.0
    %298 = vmatprep.subr.mxu0 0.0
    %299 = vmatpush1.msra.mxu0 0.0
    %300 = vmatprep.subr.mxu0 0.0
    %301 = vmatpush1.msra.mxu0 0.0
    %302 = vmatprep.subr.mxu0 0.0
    %303 = vmatpush1.msra.mxu0 0.0
    %304 = vmatprep.subr.mxu0 0.0
    %305 = vmatpush1.msra.mxu0 0.0
    %306 = vmatprep.subr.mxu0 0.0
    %307 = vmatpush1.msra.mxu0 0.0
    %308 = vmatprep.subr.mxu0 0.0
    %309 = vmatpush1.msra.mxu0 0.0
    %310 = vmatprep.subr.mxu0 0.0
    %311 = vmatpush1.msra.mxu0 0.0
    %312 = vmatprep.subr.mxu0 0.0
    %313 = vmatpush1.msra.mxu0 0.0
    %314 = vmatprep.subr.mxu0 0.0
    %315 = vmatpush1.msra.mxu0 %v62
    %316 = vmatprep.subr.mxu0 0.0
    %317 = vmatpush1.msra.mxu0 %v61
    %318 = vmatprep.subr.mxu0 0.0
    %319 = vmatpush1.msra.mxu0 %v60
    %320 = vmatprep.subr.mxu0 0.0
    %321 = vmatpush1.msra.mxu0 %v59
    %322 = vmatprep.subr.mxu0 0.0
    %323 = vmatpush2.msra.mxu0 0.0
    %324 = vmatprep.subr.mxu0 0.0
    %325 = vmatpush2.msra.mxu0 0.0
    %326 = vmatprep.subr.mxu0 0.0
    %327 = vmatpush2.msra.mxu0 0.0
    %328 = vmatprep.subr.mxu0 0.0
    %329 = vmatpush2.msra.mxu0 0.0
    %330 = vmatprep.subr.mxu0 0.0
    %331 = vmatpush2.msra.mxu0 0.0
    %332 = vmatprep.subr.mxu0 0.0
    %333 = vmatpush2.msra.mxu0 0.0
    %334 = vmatprep.subr.mxu0 0.0
    %335 = vmatpush2.msra.mxu0 0.0
    %336 = vmatprep.subr.mxu0 0.0
    %337 = vmatpush2.msra.mxu0 0.0
    %338 = vmatprep.subr.mxu0 0.0
    %339 = vmatpush2.msra.mxu0 0.0
    %340 = vmatprep.subr.mxu0 0.0
    %341 = vmatpush2.msra.mxu0 0.0
    %342 = vmatprep.subr.mxu0 0.0
    %343 = vmatpush2.msra.mxu0 0.0
    %344 = vmatprep.subr.mxu0 0.0
    %345 = vmatpush2.msra.mxu0 0.0
    %346 = vmatprep.subr.mxu0 0.0
    %347 = vmatpush2.msra.mxu0 0.0
    %348 = vmatprep.subr.mxu0 0.0
    %349 = vmatpush2.msra.mxu0 0.0
    %350 = vmatprep.subr.mxu0 0.0
    %351 = vmatpush2.msra.mxu0 0.0
    %352 = vmatprep.subr.mxu0 0.0
    %353 = vmatpush2.msra.mxu0 0.0
    %354 = vmatprep.mubr.f32.mxu0 0.0
    %355 = vmatmul.mubr.f32.gmra.mxu0 %v288
    %v356 = vpop.f32.mrf.mxu0
    %v357 = vadd.f32 0.0, %v356
    %v358 = vpop.f32.mrf.mxu0
    %359 = vdwg.mxu0
    %v360 = vadd.f32 %v284, %v357
    %v361 = vxor.u32 %v360, 2147483648
    %v362 = vmul.f32 %v361, 1.442695
    %v363 = vpow.pop %v362
    %v364 = vadd.f32 %v363, 1.0
    %v365 = vrcp.pop %v364
    %v366 = vmul.f32 1.0, %v365
    %v367 = vmul.f32 %v366, 2.0
    %v368 = vsub.f32 %v367, 1.0
    %v369 = vmul.f32 %v366, %v268
    %371 = vrot.lane.b32.xlu0 %v368, 64
    %v372 = vpop.permute.xlu0 %371
    %v374 = vmul.f32 %v366, %v372
    %376 = vrot.lane.b32.xlu0 %v374, 32
    %v377 = vpop.permute.xlu0 %376
    %v379 = vadd.f32 %v369, %v377
    %v380 = vmul.f32 %v379, 2.0
    %v381 = vxor.u32 %v380, 2147483648
    %v382 = vmul.f32 %v381, 1.442695
    %v383 = vpow.pop %v382
    %v384 = vadd.f32 %v383, 1.0
    %v385 = vrcp.pop %v384
    %v386 = vmul.f32 1.0, %v385
    %v387 = vmul.f32 %v386, 2.0
    %v388 = vsub.f32 %v387, 1.0
    %390 = vrot.lane.b32.xlu0 %v388, 64
    %v391 = vpop.permute.xlu0 %390
    %v393 = vmul.f32 %v366, %v391
    %s394 = scalar_lea.vmem [#allocation2], 24
    %v395 = vld [vmem:[%s394] sm:$0xff]
    %397 = vrot.lane.b32.xlu0 %v393, 32
    %v398 = vpop.permute.xlu0 %397
    %v399 = vsel %vm64, %v398, 0
    %401 = vmatprep.subr.mxu0 0.0
    %402 = vmatpush1.msra.mxu0 0.0
    %403 = vmatprep.subr.mxu0 0.0
    %404 = vmatpush1.msra.mxu0 0.0
    %405 = vmatprep.subr.mxu0 0.0
    %406 = vmatpush1.msra.mxu0 0.0
    %407 = vmatprep.subr.mxu0 0.0
    %408 = vmatpush1.msra.mxu0 0.0
    %409 = vmatprep.subr.mxu0 0.0
    %410 = vmatpush1.msra.mxu0 0.0
    %411 = vmatprep.subr.mxu0 0.0
    %412 = vmatpush1.msra.mxu0 0.0
    %413 = vmatprep.subr.mxu0 0.0
    %414 = vmatpush1.msra.mxu0 0.0
    %415 = vmatprep.subr.mxu0 0.0
    %416 = vmatpush1.msra.mxu0 0.0
    %417 = vmatprep.subr.mxu0 0.0
    %418 = vmatpush1.msra.mxu0 0.0
    %419 = vmatprep.subr.mxu0 0.0
    %420 = vmatpush1.msra.mxu0 0.0
    %421 = vmatprep.subr.mxu0 0.0
    %422 = vmatpush1.msra.mxu0 0.0
    %423 = vmatprep.subr.mxu0 0.0
    %424 = vmatpush1.msra.mxu0 0.0
    %425 = vmatprep.subr.mxu0 0.0
    %426 = vmatpush1.msra.mxu0 %v62
    %427 = vmatprep.subr.mxu0 0.0
    %428 = vmatpush1.msra.mxu0 %v61
    %429 = vmatprep.subr.mxu0 0.0
    %430 = vmatpush1.msra.mxu0 %v60
    %431 = vmatprep.subr.mxu0 0.0
    %432 = vmatpush1.msra.mxu0 %v59
    %433 = vmatprep.subr.mxu0 0.0
    %434 = vmatpush2.msra.mxu0 0.0
    %435 = vmatprep.subr.mxu0 0.0
    %436 = vmatpush2.msra.mxu0 0.0
    %437 = vmatprep.subr.mxu0 0.0
    %438 = vmatpush2.msra.mxu0 0.0
    %439 = vmatprep.subr.mxu0 0.0
    %440 = vmatpush2.msra.mxu0 0.0
    %441 = vmatprep.subr.mxu0 0.0
    %442 = vmatpush2.msra.mxu0 0.0
    %443 = vmatprep.subr.mxu0 0.0
    %444 = vmatpush2.msra.mxu0 0.0
    %445 = vmatprep.subr.mxu0 0.0
    %446 = vmatpush2.msra.mxu0 0.0
    %447 = vmatprep.subr.mxu0 0.0
    %448 = vmatpush2.msra.mxu0 0.0
    %449 = vmatprep.subr.mxu0 0.0
    %450 = vmatpush2.msra.mxu0 0.0
    %451 = vmatprep.subr.mxu0 0.0
    %452 = vmatpush2.msra.mxu0 0.0
    %453 = vmatprep.subr.mxu0 0.0
    %454 = vmatpush2.msra.mxu0 0.0
    %455 = vmatprep.subr.mxu0 0.0
    %456 = vmatpush2.msra.mxu0 0.0
    %457 = vmatprep.subr.mxu0 0.0
    %458 = vmatpush2.msra.mxu0 0.0
    %459 = vmatprep.subr.mxu0 0.0
    %460 = vmatpush2.msra.mxu0 0.0
    %461 = vmatprep.subr.mxu0 0.0
    %462 = vmatpush2.msra.mxu0 0.0
    %463 = vmatprep.subr.mxu0 0.0
    %464 = vmatpush2.msra.mxu0 0.0
    %465 = vmatprep.mubr.f32.mxu0 0.0
    %466 = vmatmul.mubr.f32.gmra.mxu0 %v399
    %v467 = vpop.f32.mrf.mxu0
    %v468 = vadd.f32 0.0, %v467
    %v469 = vpop.f32.mrf.mxu0
    %470 = vdwg.mxu0
    %v471 = vadd.f32 %v395, %v468
    %v472 = vxor.u32 %v471, 2147483648
    %v473 = vmul.f32 %v472, 1.442695
    %v474 = vpow.pop %v473
    %v475 = vadd.f32 %v474, 1.0
    %v476 = vrcp.pop %v475
    %v477 = vmul.f32 1.0, %v476
    %v478 = vmul.f32 %v477, 2.0
    %v479 = vsub.f32 %v478, 1.0
    %v480 = vmul.f32 %v477, %v379
    %482 = vrot.lane.b32.xlu0 %v479, 64
    %v483 = vpop.permute.xlu0 %482
    %v485 = vmul.f32 %v477, %v483
    %487 = vrot.lane.b32.xlu0 %v485, 32
    %v488 = vpop.permute.xlu0 %487
    %v490 = vadd.f32 %v480, %v488
    %v491 = vmul.f32 %v490, 2.0
    %v492 = vxor.u32 %v491, 2147483648
    %v493 = vmul.f32 %v492, 1.442695
    %v494 = vpow.pop %v493
    %v495 = vadd.f32 %v494, 1.0
    %v496 = vrcp.pop %v495
    %v497 = vmul.f32 1.0, %v496
    %v498 = vmul.f32 %v497, 2.0
    %v499 = vsub.f32 %v498, 1.0
    %501 = vrot.lane.b32.xlu0 %v499, 64
    %v502 = vpop.permute.xlu0 %501
    %v504 = vmul.f32 %v477, %v502
    %s505 = scalar_lea.vmem [#allocation2], 32
    %v506 = vld [vmem:[%s505] sm:$0xff]
    %508 = vrot.lane.b32.xlu0 %v504, 32
    %v509 = vpop.permute.xlu0 %508
    %v510 = vsel %vm64, %v509, 0
    %512 = vmatprep.subr.mxu0 0.0
    %513 = vmatpush1.msra.mxu0 0.0
    %514 = vmatprep.subr.mxu0 0.0
    %515 = vmatpush1.msra.mxu0 0.0
    %516 = vmatprep.subr.mxu0 0.0
    %517 = vmatpush1.msra.mxu0 0.0
    %518 = vmatprep.subr.mxu0 0.0
    %519 = vmatpush1.msra.mxu0 0.0
    %520 = vmatprep.subr.mxu0 0.0
    %521 = vmatpush1.msra.mxu0 0.0
    %522 = vmatprep.subr.mxu0 0.0
    %523 = vmatpush1.msra.mxu0 0.0
    %524 = vmatprep.subr.mxu0 0.0
    %525 = vmatpush1.msra.mxu0 0.0
    %526 = vmatprep.subr.mxu0 0.0
    %527 = vmatpush1.msra.mxu0 0.0
    %528 = vmatprep.subr.mxu0 0.0
    %529 = vmatpush1.msra.mxu0 0.0
    %530 = vmatprep.subr.mxu0 0.0
    %531 = vmatpush1.msra.mxu0 0.0
    %532 = vmatprep.subr.mxu0 0.0
    %533 = vmatpush1.msra.mxu0 0.0
    %534 = vmatprep.subr.mxu0 0.0
    %535 = vmatpush1.msra.mxu0 0.0
    %536 = vmatprep.subr.mxu0 0.0
    %537 = vmatpush1.msra.mxu0 %v62
    %538 = vmatprep.subr.mxu0 0.0
    %539 = vmatpush1.msra.mxu0 %v61
    %540 = vmatprep.subr.mxu0 0.0
    %541 = vmatpush1.msra.mxu0 %v60
    %542 = vmatprep.subr.mxu0 0.0
    %543 = vmatpush1.msra.mxu0 %v59
    %544 = vmatprep.subr.mxu0 0.0
    %545 = vmatpush2.msra.mxu0 0.0
    %546 = vmatprep.subr.mxu0 0.0
    %547 = vmatpush2.msra.mxu0 0.0
    %548 = vmatprep.subr.mxu0 0.0
    %549 = vmatpush2.msra.mxu0 0.0
    %550 = vmatprep.subr.mxu0 0.0
    %551 = vmatpush2.msra.mxu0 0.0
    %552 = vmatprep.subr.mxu0 0.0
    %553 = vmatpush2.msra.mxu0 0.0
    %554 = vmatprep.subr.mxu0 0.0
    %555 = vmatpush2.msra.mxu0 0.0
    %556 = vmatprep.subr.mxu0 0.0
    %557 = vmatpush2.msra.mxu0 0.0
    %558 = vmatprep.subr.mxu0 0.0
    %559 = vmatpush2.msra.mxu0 0.0
    %560 = vmatprep.subr.mxu0 0.0
    %561 = vmatpush2.msra.mxu0 0.0
    %562 = vmatprep.subr.mxu0 0.0
    %563 = vmatpush2.msra.mxu0 0.0
    %564 = vmatprep.subr.mxu0 0.0
    %565 = vmatpush2.msra.mxu0 0.0
    %566 = vmatprep.subr.mxu0 0.0
    %567 = vmatpush2.msra.mxu0 0.0
    %568 = vmatprep.subr.mxu0 0.0
    %569 = vmatpush2.msra.mxu0 0.0
    %570 = vmatprep.subr.mxu0 0.0
    %571 = vmatpush2.msra.mxu0 0.0
    %572 = vmatprep.subr.mxu0 0.0
    %573 = vmatpush2.msra.mxu0 0.0
    %574 = vmatprep.subr.mxu0 0.0
    %575 = vmatpush2.msra.mxu0 0.0
    %576 = vmatprep.mubr.f32.mxu0 0.0
    %577 = vmatmul.mubr.f32.gmra.mxu0 %v510
    %v578 = vpop.f32.mrf.mxu0
    %v579 = vadd.f32 0.0, %v578
    %v580 = vpop.f32.mrf.mxu0
    %581 = vdwg.mxu0
    %v582 = vadd.f32 %v506, %v579
    %v583 = vxor.u32 %v582, 2147483648
    %v584 = vmul.f32 %v583, 1.442695
    %v585 = vpow.pop %v584
    %v586 = vadd.f32 %v585, 1.0
    %v587 = vrcp.pop %v586
    %v588 = vmul.f32 1.0, %v587
    %v589 = vmul.f32 %v588, 2.0
    %v590 = vsub.f32 %v589, 1.0
    %v591 = vmul.f32 %v588, %v490
    %593 = vrot.lane.b32.xlu0 %v590, 64
    %v594 = vpop.permute.xlu0 %593
    %v596 = vmul.f32 %v588, %v594
    %598 = vrot.lane.b32.xlu0 %v596, 32
    %v599 = vpop.permute.xlu0 %598
    %v601 = vadd.f32 %v591, %v599
    %v602 = vmul.f32 %v601, 2.0
    %v603 = vxor.u32 %v602, 2147483648
    %v604 = vmul.f32 %v603, 1.442695
    %v605 = vpow.pop %v604
    %v606 = vadd.f32 %v605, 1.0
    %v607 = vrcp.pop %v606
    %v608 = vmul.f32 1.0, %v607
    %v609 = vmul.f32 %v608, 2.0
    %v610 = vsub.f32 %v609, 1.0
    %612 = vrot.lane.b32.xlu0 %v610, 64
    %v613 = vpop.permute.xlu0 %612
    %v615 = vmul.f32 %v588, %v613
    %s616 = scalar_lea.vmem [#allocation2], 40
    %v617 = vld [vmem:[%s616] sm:$0xff]
    %619 = vrot.lane.b32.xlu0 %v615, 32
    %v620 = vpop.permute.xlu0 %619
    %v621 = vsel %vm64, %v620, 0
    %623 = vmatprep.subr.mxu0 0.0
    %624 = vmatpush1.msra.mxu0 0.0
    %625 = vmatprep.subr.mxu0 0.0
    %626 = vmatpush1.msra.mxu0 0.0
    %627 = vmatprep.subr.mxu0 0.0
    %628 = vmatpush1.msra.mxu0 0.0
    %629 = vmatprep.subr.mxu0 0.0
    %630 = vmatpush1.msra.mxu0 0.0
    %631 = vmatprep.subr.mxu0 0.0
    %632 = vmatpush1.msra.mxu0 0.0
    %633 = vmatprep.subr.mxu0 0.0
    %634 = vmatpush1.msra.mxu0 0.0
    %635 = vmatprep.subr.mxu0 0.0
    %636 = vmatpush1.msra.mxu0 0.0
    %637 = vmatprep.subr.mxu0 0.0
    %638 = vmatpush1.msra.mxu0 0.0
    %639 = vmatprep.subr.mxu0 0.0
    %640 = vmatpush1.msra.mxu0 0.0
    %641 = vmatprep.subr.mxu0 0.0
    %642 = vmatpush1.msra.mxu0 0.0
    %643 = vmatprep.subr.mxu0 0.0
    %644 = vmatpush1.msra.mxu0 0.0
    %645 = vmatprep.subr.mxu0 0.0
    %646 = vmatpush1.msra.mxu0 0.0
    %647 = vmatprep.subr.mxu0 0.0
    %648 = vmatpush1.msra.mxu0 %v62
    %649 = vmatprep.subr.mxu0 0.0
    %650 = vmatpush1.msra.mxu0 %v61
    %651 = vmatprep.subr.mxu0 0.0
    %652 = vmatpush1.msra.mxu0 %v60
    %653 = vmatprep.subr.mxu0 0.0
    %654 = vmatpush1.msra.mxu0 %v59
    %655 = vmatprep.subr.mxu0 0.0
    %656 = vmatpush2.msra.mxu0 0.0
    %657 = vmatprep.subr.mxu0 0.0
    %658 = vmatpush2.msra.mxu0 0.0
    %659 = vmatprep.subr.mxu0 0.0
    %660 = vmatpush2.msra.mxu0 0.0
    %661 = vmatprep.subr.mxu0 0.0
    %662 = vmatpush2.msra.mxu0 0.0
    %663 = vmatprep.subr.mxu0 0.0
    %664 = vmatpush2.msra.mxu0 0.0
    %665 = vmatprep.subr.mxu0 0.0
    %666 = vmatpush2.msra.mxu0 0.0
    %667 = vmatprep.subr.mxu0 0.0
    %668 = vmatpush2.msra.mxu0 0.0
    %669 = vmatprep.subr.mxu0 0.0
    %670 = vmatpush2.msra.mxu0 0.0
    %671 = vmatprep.subr.mxu0 0.0
    %672 = vmatpush2.msra.mxu0 0.0
    %673 = vmatprep.subr.mxu0 0.0
    %674 = vmatpush2.msra.mxu0 0.0
    %675 = vmatprep.subr.mxu0 0.0
    %676 = vmatpush2.msra.mxu0 0.0
    %677 = vmatprep.subr.mxu0 0.0
    %678 = vmatpush2.msra.mxu0 0.0
    %679 = vmatprep.subr.mxu0 0.0
    %680 = vmatpush2.msra.mxu0 0.0
    %681 = vmatprep.subr.mxu0 0.0
    %682 = vmatpush2.msra.mxu0 0.0
    %683 = vmatprep.subr.mxu0 0.0
    %684 = vmatpush2.msra.mxu0 0.0
    %685 = vmatprep.subr.mxu0 0.0
    %686 = vmatpush2.msra.mxu0 0.0
    %687 = vmatprep.mubr.f32.mxu0 0.0
    %688 = vmatmul.mubr.f32.gmra.mxu0 %v621
    %v689 = vpop.f32.mrf.mxu0
    %v690 = vadd.f32 0.0, %v689
    %v691 = vpop.f32.mrf.mxu0
    %692 = vdwg.mxu0
    %v693 = vadd.f32 %v617, %v690
    %v694 = vxor.u32 %v693, 2147483648
    %v695 = vmul.f32 %v694, 1.442695
    %v696 = vpow.pop %v695
    %v697 = vadd.f32 %v696, 1.0
    %v698 = vrcp.pop %v697
    %v699 = vmul.f32 1.0, %v698
    %v700 = vmul.f32 %v699, 2.0
    %v701 = vsub.f32 %v700, 1.0
    %v702 = vmul.f32 %v699, %v601
    %704 = vrot.lane.b32.xlu0 %v701, 64
    %v705 = vpop.permute.xlu0 %704
    %v707 = vmul.f32 %v699, %v705
    %709 = vrot.lane.b32.xlu0 %v707, 32
    %v710 = vpop.permute.xlu0 %709
    %v712 = vadd.f32 %v702, %v710
    %v713 = vmul.f32 %v712, 2.0
    %v714 = vxor.u32 %v713, 2147483648
    %v715 = vmul.f32 %v714, 1.442695
    %v716 = vpow.pop %v715
    %v717 = vadd.f32 %v716, 1.0
    %v718 = vrcp.pop %v717
    %v719 = vmul.f32 1.0, %v718
    %v720 = vmul.f32 %v719, 2.0
    %v721 = vsub.f32 %v720, 1.0
    %723 = vrot.lane.b32.xlu0 %v721, 64
    %v724 = vpop.permute.xlu0 %723
    %v726 = vmul.f32 %v699, %v724
    %s727 = scalar_lea.vmem [#allocation2], 48
    %v728 = vld [vmem:[%s727] sm:$0xff]
    %730 = vrot.lane.b32.xlu0 %v726, 32
    %v731 = vpop.permute.xlu0 %730
    %v732 = vsel %vm64, %v731, 0
    %734 = vmatprep.subr.mxu0 0.0
    %735 = vmatpush1.msra.mxu0 0.0
    %736 = vmatprep.subr.mxu0 0.0
    %737 = vmatpush1.msra.mxu0 0.0
    %738 = vmatprep.subr.mxu0 0.0
    %739 = vmatpush1.msra.mxu0 0.0
    %740 = vmatprep.subr.mxu0 0.0
    %741 = vmatpush1.msra.mxu0 0.0
    %742 = vmatprep.subr.mxu0 0.0
    %743 = vmatpush1.msra.mxu0 0.0
    %744 = vmatprep.subr.mxu0 0.0
    %745 = vmatpush1.msra.mxu0 0.0
    %746 = vmatprep.subr.mxu0 0.0
    %747 = vmatpush1.msra.mxu0 0.0
    %748 = vmatprep.subr.mxu0 0.0
    %749 = vmatpush1.msra.mxu0 0.0
    %750 = vmatprep.subr.mxu0 0.0
    %751 = vmatpush1.msra.mxu0 0.0
    %752 = vmatprep.subr.mxu0 0.0
    %753 = vmatpush1.msra.mxu0 0.0
    %754 = vmatprep.subr.mxu0 0.0
    %755 = vmatpush1.msra.mxu0 0.0
    %756 = vmatprep.subr.mxu0 0.0
    %757 = vmatpush1.msra.mxu0 0.0
    %758 = vmatprep.subr.mxu0 0.0
    %759 = vmatpush1.msra.mxu0 %v62
    %760 = vmatprep.subr.mxu0 0.0
    %761 = vmatpush1.msra.mxu0 %v61
    %762 = vmatprep.subr.mxu0 0.0
    %763 = vmatpush1.msra.mxu0 %v60
    %764 = vmatprep.subr.mxu0 0.0
    %765 = vmatpush1.msra.mxu0 %v59
    %766 = vmatprep.subr.mxu0 0.0
    %767 = vmatpush2.msra.mxu0 0.0
    %768 = vmatprep.subr.mxu0 0.0
    %769 = vmatpush2.msra.mxu0 0.0
    %770 = vmatprep.subr.mxu0 0.0
    %771 = vmatpush2.msra.mxu0 0.0
    %772 = vmatprep.subr.mxu0 0.0
    %773 = vmatpush2.msra.mxu0 0.0
    %774 = vmatprep.subr.mxu0 0.0
    %775 = vmatpush2.msra.mxu0 0.0
    %776 = vmatprep.subr.mxu0 0.0
    %777 = vmatpush2.msra.mxu0 0.0
    %778 = vmatprep.subr.mxu0 0.0
    %779 = vmatpush2.msra.mxu0 0.0
    %780 = vmatprep.subr.mxu0 0.0
    %781 = vmatpush2.msra.mxu0 0.0
    %782 = vmatprep.subr.mxu0 0.0
    %783 = vmatpush2.msra.mxu0 0.0
    %784 = vmatprep.subr.mxu0 0.0
    %785 = vmatpush2.msra.mxu0 0.0
    %786 = vmatprep.subr.mxu0 0.0
    %787 = vmatpush2.msra.mxu0 0.0
    %788 = vmatprep.subr.mxu0 0.0
    %789 = vmatpush2.msra.mxu0 0.0
    %790 = vmatprep.subr.mxu0 0.0
    %791 = vmatpush2.msra.mxu0 0.0
    %792 = vmatprep.subr.mxu0 0.0
    %793 = vmatpush2.msra.mxu0 0.0
    %794 = vmatprep.subr.mxu0 0.0
    %795 = vmatpush2.msra.mxu0 0.0
    %796 = vmatprep.subr.mxu0 0.0
    %797 = vmatpush2.msra.mxu0 0.0
    %798 = vmatprep.mubr.f32.mxu0 0.0
    %799 = vmatmul.mubr.f32.gmra.mxu0 %v732
    %v800 = vpop.f32.mrf.mxu0
    %v801 = vadd.f32 0.0, %v800
    %v802 = vpop.f32.mrf.mxu0
    %803 = vdwg.mxu0
    %v804 = vadd.f32 %v728, %v801
    %v805 = vxor.u32 %v804, 2147483648
    %v806 = vmul.f32 %v805, 1.442695
    %v807 = vpow.pop %v806
    %v808 = vadd.f32 %v807, 1.0
    %v809 = vrcp.pop %v808
    %v810 = vmul.f32 1.0, %v809
    %v811 = vmul.f32 %v810, 2.0
    %v812 = vsub.f32 %v811, 1.0
    %v813 = vmul.f32 %v810, %v712
    %815 = vrot.lane.b32.xlu0 %v812, 64
    %v816 = vpop.permute.xlu0 %815
    %v818 = vmul.f32 %v810, %v816
    %820 = vrot.lane.b32.xlu0 %v818, 32
    %v821 = vpop.permute.xlu0 %820
    %v823 = vadd.f32 %v813, %v821
    %v824 = vmul.f32 %v823, 2.0
    %v825 = vxor.u32 %v824, 2147483648
    %v826 = vmul.f32 %v825, 1.442695
    %v827 = vpow.pop %v826
    %v828 = vadd.f32 %v827, 1.0
    %v829 = vrcp.pop %v828
    %v830 = vmul.f32 1.0, %v829
    %v831 = vmul.f32 %v830, 2.0
    %v832 = vsub.f32 %v831, 1.0
    %834 = vrot.lane.b32.xlu0 %v832, 64
    %v835 = vpop.permute.xlu0 %834
    %v837 = vmul.f32 %v810, %v835
    %s838 = scalar_lea.vmem [#allocation2], 56
    %v839 = vld [vmem:[%s838] sm:$0xff]
    %841 = vrot.lane.b32.xlu0 %v837, 32
    %v842 = vpop.permute.xlu0 %841
    %v843 = vsel %vm64, %v842, 0
    %845 = vmatprep.subr.mxu0 0.0
    %846 = vmatpush1.msra.mxu0 0.0
    %847 = vmatprep.subr.mxu0 0.0
    %848 = vmatpush1.msra.mxu0 0.0
    %849 = vmatprep.subr.mxu0 0.0
    %850 = vmatpush1.msra.mxu0 0.0
    %851 = vmatprep.subr.mxu0 0.0
    %852 = vmatpush1.msra.mxu0 0.0
    %853 = vmatprep.subr.mxu0 0.0
    %854 = vmatpush1.msra.mxu0 0.0
    %855 = vmatprep.subr.mxu0 0.0
    %856 = vmatpush1.msra.mxu0 0.0
    %857 = vmatprep.subr.mxu0 0.0
    %858 = vmatpush1.msra.mxu0 0.0
    %859 = vmatprep.subr.mxu0 0.0
    %860 = vmatpush1.msra.mxu0 0.0
    %861 = vmatprep.subr.mxu0 0.0
    %862 = vmatpush1.msra.mxu0 0.0
    %863 = vmatprep.subr.mxu0 0.0
    %864 = vmatpush1.msra.mxu0 0.0
    %865 = vmatprep.subr.mxu0 0.0
    %866 = vmatpush1.msra.mxu0 0.0
    %867 = vmatprep.subr.mxu0 0.0
    %868 = vmatpush1.msra.mxu0 0.0
    %869 = vmatprep.subr.mxu0 0.0
    %870 = vmatpush1.msra.mxu0 %v62
    %871 = vmatprep.subr.mxu0 0.0
    %872 = vmatpush1.msra.mxu0 %v61
    %873 = vmatprep.subr.mxu0 0.0
    %874 = vmatpush1.msra.mxu0 %v60
    %875 = vmatprep.subr.mxu0 0.0
    %876 = vmatpush1.msra.mxu0 %v59
    %877 = vmatprep.subr.mxu0 0.0
    %878 = vmatpush2.msra.mxu0 0.0
    %879 = vmatprep.subr.mxu0 0.0
    %880 = vmatpush2.msra.mxu0 0.0
    %881 = vmatprep.subr.mxu0 0.0
    %882 = vmatpush2.msra.mxu0 0.0
    %883 = vmatprep.subr.mxu0 0.0
    %884 = vmatpush2.msra.mxu0 0.0
    %885 = vmatprep.subr.mxu0 0.0
    %886 = vmatpush2.msra.mxu0 0.0
    %887 = vmatprep.subr.mxu0 0.0
    %888 = vmatpush2.msra.mxu0 0.0
    %889 = vmatprep.subr.mxu0 0.0
    %890 = vmatpush2.msra.mxu0 0.0
    %891 = vmatprep.subr.mxu0 0.0
    %892 = vmatpush2.msra.mxu0 0.0
    %893 = vmatprep.subr.mxu0 0.0
    %894 = vmatpush2.msra.mxu0 0.0
    %895 = vmatprep.subr.mxu0 0.0
    %896 = vmatpush2.msra.mxu0 0.0
    %897 = vmatprep.subr.mxu0 0.0
    %898 = vmatpush2.msra.mxu0 0.0
    %899 = vmatprep.subr.mxu0 0.0
    %900 = vmatpush2.msra.mxu0 0.0
    %901 = vmatprep.subr.mxu0 0.0
    %902 = vmatpush2.msra.mxu0 0.0
    %903 = vmatprep.subr.mxu0 0.0
    %904 = vmatpush2.msra.mxu0 0.0
    %905 = vmatprep.subr.mxu0 0.0
    %906 = vmatpush2.msra.mxu0 0.0
    %907 = vmatprep.subr.mxu0 0.0
    %908 = vmatpush2.msra.mxu0 0.0
    %909 = vmatprep.mubr.f32.mxu0 0.0
    %910 = vmatmul.mubr.f32.gmra.mxu0 %v843
    %v911 = vpop.f32.mrf.mxu0
    %v912 = vadd.f32 0.0, %v911
    %v913 = vpop.f32.mrf.mxu0
    %914 = vdwg.mxu0
    %v915 = vadd.f32 %v839, %v912
    %v916 = vxor.u32 %v915, 2147483648
    %v917 = vmul.f32 %v916, 1.442695
    %v918 = vpow.pop %v917
    %v919 = vadd.f32 %v918, 1.0
    %v920 = vrcp.pop %v919
    %v921 = vmul.f32 1.0, %v920
    %v922 = vmul.f32 %v921, 2.0
    %v923 = vsub.f32 %v922, 1.0
    %v924 = vmul.f32 %v921, %v823
    %926 = vrot.lane.b32.xlu0 %v923, 64
    %v927 = vpop.permute.xlu0 %926
    %v929 = vmul.f32 %v921, %v927
    %931 = vrot.lane.b32.xlu0 %v929, 32
    %v932 = vpop.permute.xlu0 %931
    %v934 = vadd.f32 %v924, %v932
    %v935 = vmul.f32 %v934, 2.0
    %v936 = vxor.u32 %v935, 2147483648
    %v937 = vmul.f32 %v936, 1.442695
    %v938 = vpow.pop %v937
    %v939 = vadd.f32 %v938, 1.0
    %v940 = vrcp.pop %v939
    %v941 = vmul.f32 1.0, %v940
    %v942 = vmul.f32 %v941, 2.0
    %v943 = vsub.f32 %v942, 1.0
    %945 = vrot.lane.b32.xlu0 %v943, 64
    %v946 = vpop.permute.xlu0 %945
    %v948 = vmul.f32 %v921, %v946
    %v949 = vld [vmem:[#allocation7] sm:$0xff]
    %v950 = vld [vmem:[#allocation7 + $0x8] sm:$0xff]
    %v951 = vld [vmem:[#allocation7 + $0x10] sm:$0xff]
    %v952 = vld [vmem:[#allocation7 + $0x18] sm:$0xff]
    %v953 = vld [vmem:[%s3] sm:$0x1]
    %v955 = vlaneseq
    %v956 = vshrl.u32 %v955, 7
    %v957 = vsub.s32 0, %v956
    %v958 = vrot.slane %v953, %v957
    %961 = vrot.lane.b32.xlu0 %v948, 32
    %v962 = vpop.permute.xlu0 %961
    %v963 = vsel %vm64, %v962, 0
    %965 = vmatprep.subr.mxu0 0.0
    %966 = vmatpush1.msra.mxu0 0.0
    %967 = vmatprep.subr.mxu0 0.0
    %968 = vmatpush1.msra.mxu0 0.0
    %969 = vmatprep.subr.mxu0 0.0
    %970 = vmatpush1.msra.mxu0 0.0
    %971 = vmatprep.subr.mxu0 0.0
    %972 = vmatpush1.msra.mxu0 0.0
    %973 = vmatprep.subr.mxu0 0.0
    %974 = vmatpush1.msra.mxu0 0.0
    %975 = vmatprep.subr.mxu0 0.0
    %976 = vmatpush1.msra.mxu0 0.0
    %977 = vmatprep.subr.mxu0 0.0
    %978 = vmatpush1.msra.mxu0 0.0
    %979 = vmatprep.subr.mxu0 0.0
    %980 = vmatpush1.msra.mxu0 0.0
    %981 = vmatprep.subr.mxu0 0.0
    %982 = vmatpush1.msra.mxu0 0.0
    %983 = vmatprep.subr.mxu0 0.0
    %984 = vmatpush1.msra.mxu0 0.0
    %985 = vmatprep.subr.mxu0 0.0
    %986 = vmatpush1.msra.mxu0 0.0
    %987 = vmatprep.subr.mxu0 0.0
    %988 = vmatpush1.msra.mxu0 0.0
    %989 = vmatprep.subr.mxu0 0.0
    %990 = vmatpush1.msra.mxu0 %v952
    %991 = vmatprep.subr.mxu0 0.0
    %992 = vmatpush1.msra.mxu0 %v951
    %993 = vmatprep.subr.mxu0 0.0
    %994 = vmatpush1.msra.mxu0 %v950
    %995 = vmatprep.subr.mxu0 0.0
    %996 = vmatpush1.msra.mxu0 %v949
    %997 = vmatprep.subr.mxu0 0.0
    %998 = vmatpush2.msra.mxu0 0.0
    %999 = vmatprep.subr.mxu0 0.0
    %1000 = vmatpush2.msra.mxu0 0.0
    %1001 = vmatprep.subr.mxu0 0.0
    %1002 = vmatpush2.msra.mxu0 0.0
    %1003 = vmatprep.subr.mxu0 0.0
    %1004 = vmatpush2.msra.mxu0 0.0
    %1005 = vmatprep.subr.mxu0 0.0
    %1006 = vmatpush2.msra.mxu0 0.0
    %1007 = vmatprep.subr.mxu0 0.0
    %1008 = vmatpush2.msra.mxu0 0.0
    %1009 = vmatprep.subr.mxu0 0.0
    %1010 = vmatpush2.msra.mxu0 0.0
    %1011 = vmatprep.subr.mxu0 0.0
    %1012 = vmatpush2.msra.mxu0 0.0
    %1013 = vmatprep.subr.mxu0 0.0
    %1014 = vmatpush2.msra.mxu0 0.0
    %1015 = vmatprep.subr.mxu0 0.0
    %1016 = vmatpush2.msra.mxu0 0.0
    %1017 = vmatprep.subr.mxu0 0.0
    %1018 = vmatpush2.msra.mxu0 0.0
    %1019 = vmatprep.subr.mxu0 0.0
    %1020 = vmatpush2.msra.mxu0 0.0
    %1021 = vmatprep.subr.mxu0 0.0
    %1022 = vmatpush2.msra.mxu0 0.0
    %1023 = vmatprep.subr.mxu0 0.0
    %1024 = vmatpush2.msra.mxu0 0.0
    %1025 = vmatprep.subr.mxu0 0.0
    %1026 = vmatpush2.msra.mxu0 0.0
    %1027 = vmatprep.subr.mxu0 0.0
    %1028 = vmatpush2.msra.mxu0 0.0
    %1029 = vmatprep.mubr.f32.mxu0 0.0
    %1030 = vmatmul.mubr.f32.gmra.mxu0 %v963
    %v1031 = vpop.f32.mrf.mxu0
    %v1032 = vadd.f32 %v958, %v1031
    %v1033 = vpop.f32.mrf.mxu0
    %1034 = vdwg.mxu0
    %1035 = vst [vmem:[#allocation8] sm:$0xff] %v1032
    // Predicated region
    $region30: #{tpu_custom_call.1} parent=1 // pred_check
      _
    $region31: #{tpu_custom_call.1} parent=1 // pred_check_branch
      %1037 = sbr.rel (0) target = $region33
    $region32: #{tpu_custom_call.1} parent=1 // pred_region
      %s1039 = ssub.s32 128, 128
      %1040 = vsyncadd [#allocation4], %s1039
      %s1042 = sshll.u32 [#allocation8], 4
      %s1043 = int_to_ptr.vmem [resolvable:$true] %s1042
      %1045 = dma.vmem_to_hbm [thread:$0]  %s1043, 128, %s4, [#allocation4]
    $region33: #{tpu_custom_call.1} parent=1 // pred_fallthru
      _
    // Predicated region
    $region34: #{tpu_custom_call.1} parent=1 // pred_check
      _
    $region35: #{tpu_custom_call.1} parent=1 // pred_check_branch
      %1047 = sbr.rel (0) target = $region37
    $region36: #{tpu_custom_call.1} parent=1 // pred_region
      %1048 = dma.done [#allocation4], 128
    $region37: #{tpu_custom_call.1} parent=1 // pred_fallthru
      _
    %1049 = vsyncpa [#allocation3], 1
    %1050 = vsyncpa [#allocation6], 1
    %1051 = vsyncpa [#allocation4], 1

</llo_original>
